<compile_context>
chip_gen: v6e
topology: v6e:2x2x1
jax: 0.10.0
libtpu: 0.0.40
codegen_flags: <defaults>
</compile_context>

<pallas_src>
import functools

import jax
import jax.numpy as jnp
from jax.experimental import pallas as pl
from jax.experimental.pallas import tpu as pltpu


def _round_up(x, m):
    return ((x + m - 1) // m) * m


# ----------------------------- Pallas kernel --------------------------------
def _reward_kernel(state_ref, idx_ref, w1s_ref, pair_ref, w2_ref, b2_ref,
                   w3_ref, b3_ref, o_ref, *, num_actions):
    """Fused ActionEmbedding + reward_net (Linear-ReLU-Linear-ReLU-Linear)."""
    f32 = jnp.float32
    tb = state_ref.shape[0]          # batch tile rows
    npair = pair_ref.shape[0]        # padded num_actions**2 pair slots

    # One-hot over joint action pairs (a0*A + a1): one iota + one compare.
    a0 = idx_ref[:, 0:1]             # [tb, 1] int32
    a1 = idx_ref[:, 1:2]             # [tb, 1] int32
    pair_idx = a0 * num_actions + a1                                  # [tb, 1]
    j = jax.lax.broadcasted_iota(jnp.int32, (tb, npair), 1)
    onehot = (j == pair_idx).astype(pair_ref.dtype)                   # [tb, P]

    # Layer 1: lane-aligned state matmul (K=128) + tiny pair-table matmul
    # (K=40, bias b1 already folded into the pair table).
    h1 = jnp.dot(state_ref[...], w1s_ref[...], preferred_element_type=f32)
    h1 = h1 + jnp.dot(onehot, pair_ref[...], preferred_element_type=f32)
    h1 = jnp.maximum(h1, 0.0)

    # Layer 2.
    h2 = jnp.dot(h1.astype(w2_ref.dtype), w2_ref[...],
                 preferred_element_type=f32)
    h2 = jnp.maximum(h2 + b2_ref[...], 0.0)

    # Layer 3: [tb,128] @ [128,1] -> (tb,1) block, written straight to [B,1].
    r = jnp.dot(h2, w3_ref[...], preferred_element_type=f32)
    o_ref[...] = r + b3_ref[0]


# ------------------------------- Wrapper -------------------------------------
@functools.partial(jax.jit, static_argnames=("num_actions", "block_b"))
def reward_forward_pallas(state_embed, action_indices,
                          w1s, pair, w2, b2, w3, b3,
                          *, num_actions, block_b=2048):
    """state_embed: [B, S], action_indices: [B, 2] i32 -> [B, 1] f32."""
    B, S = state_embed.shape
    Hp = w1s.shape[1]
    P = pair.shape[0]

    if B == 0:
        return jnp.zeros((0, 1), jnp.float32)

    # Batch tile: multiple of 16 (bf16 sublane tiling), capped by block_b, and
    # clamped to ~ceil(B/8) so large B gives >=8 grid steps (v7x dual-TC +
    # pipeline depth).
    align = 16
    bb = _round_up(max(pl.cdiv(B, 8), 1), align)
    bb = max(min(block_b, bb), align)
    nb = pl.cdiv(B, bb)                      # partial last block handled by Pallas

    kernel = functools.partial(_reward_kernel, num_actions=num_actions)

    itm = state_embed.dtype.itemsize
    flops = 2 * B * (S * Hp + P * Hp + Hp * Hp + Hp)
    bytes_accessed = (
        B * (S * itm + 2 * 4 + 4)                       # state + idx + out
        + (w1s.size + pair.size + w2.size) * w1s.dtype.itemsize
        + (b2.size + w3.size + b3.size) * 4)
    cost = pl.CostEstimate(flops=flops, transcendentals=0,
                           bytes_accessed=bytes_accessed)

    # VMEM budget: state tile + (bb,2) i32 idx tile (lane-pads to 128 lanes,
    # i.e. bb*512 B!) + (bb,1) out tile (also lane-padded), x2 buffers each,
    # plus ~150 KiB of resident weights and a couple of [bb,128] f32 temps.
    vmem_est = 2 * (bb * S * itm + bb * 128 * 4 + bb * 128 * 4) \
        + 4 * bb * Hp * 4 + (1 << 20)
    vmem_limit = None
    if vmem_est > (32 << 20):
        vmem_limit = int(min(vmem_est + (8 << 20), 64 << 20))   # v7x: 64 MiB phys

    out = pl.pallas_call(
        kernel,
        out_shape=jax.ShapeDtypeStruct((B, 1), jnp.float32),
        grid_spec=pltpu.PrefetchScalarGridSpec(
            num_scalar_prefetch=0,
            grid=(nb,),
            in_specs=[
                pl.BlockSpec((bb, S), lambda i: (i, 0)),     # state tile
                pl.BlockSpec((bb, 2), lambda i: (i, 0)),     # action indices
                pl.BlockSpec((S, Hp), lambda i: (0, 0)),     # W1 (state part)
                pl.BlockSpec((P, Hp), lambda i: (0, 0)),     # pair table (+b1)
                pl.BlockSpec((Hp, Hp), lambda i: (0, 0)),    # W2
                pl.BlockSpec((1, Hp), lambda i: (0, 0)),     # b2
                pl.BlockSpec((Hp, 1), lambda i: (0, 0)),     # w3 column
                pl.BlockSpec(memory_space=pltpu.MemorySpace.SMEM),  # b3 scalar
            ],
            out_specs=pl.BlockSpec((bb, 1), lambda i: (i, 0)),
        ),
        compiler_params=pltpu.CompilerParams(
            dimension_semantics=("parallel",),
            vmem_limit_bytes=vmem_limit),
        cost_estimate=cost,
    )(state_embed, action_indices, w1s, pair, w2, b2, w3, b3)

    return out


# ------------------------------ Module wrapper -------------------------------
class SharedEncoderRewardPredictorPallas:
    """JAX/Pallas re-implementation of SharedEncoderRewardPredictor.forward."""

    def __init__(self, state_embed_dim=128, action_embed_dim=4, num_actions=6,
                 hidden_dim=64, key=None, block_b=2048, use_bf16=False):
        self.state_embed_dim = state_embed_dim
        self.action_embed_dim = action_embed_dim
        self.num_actions = num_actions
        self.hidden_dim = hidden_dim
        self._block_b = block_b
        self._use_bf16 = use_bf16
        total_input_dim = state_embed_dim + 2 * action_embed_dim

        if key is None:
            key = jax.random.PRNGKey(0)
        ks = jax.random.split(key, 7)
        f32 = jnp.float32

        # ActionEmbedding table: [num_actions, action_embed_dim]
        self.embed_table = jax.random.normal(
            ks[0], (num_actions, action_embed_dim), dtype=f32) * 0.1

        # reward_net weights, stored as [in, out] (i.e. PyTorch W.T).
        def init_linear(kw, kb, din, dout):
            lim = 1.0 / (din ** 0.5)
            w = jax.random.uniform(kw, (din, dout), minval=-lim, maxval=lim,
                                   dtype=f32)
            b = jax.random.uniform(kb, (1, dout), minval=-lim, maxval=lim,
                                   dtype=f32)
            return w, b

        self.w1, self.b1 = init_linear(ks[1], ks[2], total_input_dim, hidden_dim)
        self.w2, self.b2 = init_linear(ks[3], ks[4], hidden_dim, hidden_dim)
        self.w3, self.b3 = init_linear(ks[5], ks[6], hidden_dim, 1)

        self._prepare_kernel_params()

    def _prepare_kernel_params(self):
        """Build fused / lane-padded parameters for the kernel (done once)."""
        f32 = jnp.float32
        S, ae = self.state_embed_dim, self.action_embed_dim
        H, A = self.hidden_dim, self.num_actions
        Hp = _round_up(H, 128)            # pad hidden to full lanes (exact: zeros)
        P = _round_up(A * A, 8)           # padded joint-action pair slots

        w1_state = self.w1[:S, :]                 # [S, H]
        w1_a0 = self.w1[S:S + ae, :]              # [ae, H]
        w1_a1 = self.w1[S + ae:S + 2 * ae, :]     # [ae, H]

        # Fold embedding table, layer-1 action weights AND b1 into one table:
        #   pair[a0*A + a1] = emb[a0] @ W1_a0 + emb[a1] @ W1_a1 + b1
        e0 = self.embed_table @ w1_a0             # [A, H]
        e1 = self.embed_table @ w1_a1             # [A, H]
        pair_small = (e0[:, None, :] + e1[None, :, :]
                      + self.b1.reshape(1, 1, H)).reshape(A * A, H)
        pair = jnp.zeros((P, Hp), f32).at[:A * A, :H].set(pair_small)

        w1s = jnp.zeros((S, Hp), f32).at[:, :H].set(w1_state)
        w2p = jnp.zeros((Hp, Hp), f32).at[:H, :H].set(self.w2)
        b2p = jnp.zeros((1, Hp), f32).at[:, :H].set(self.b2)
        w3p = jnp.zeros((Hp, 1), f32).at[:H, 0].set(self.w3[:, 0])
        b3p = self.b3.reshape(-1).astype(f32)     # (1,) SMEM scalar

        if self._use_bf16:
            # bf16 storage, f32 accumulation inside the kernel.
            w1s = w1s.astype(jnp.bfloat16)
            pair = pair.astype(jnp.bfloat16)
            w2p = w2p.astype(jnp.bfloat16)

        self._kparams = (w1s, pair, w2p, b2p, w3p, b3p)

    def __call__(self, state_embed, action_indices):
        """
        state_embed:    [B, state_embed_dim] float32
        action_indices: [B, 2] int32
        returns:        [B, 1] float32
        """
        in_dtype = jnp.bfloat16 if self._use_bf16 else jnp.float32
        return reward_forward_pallas(
            state_embed.astype(in_dtype),
            action_indices.astype(jnp.int32),
            *self._kparams,
            num_actions=self.num_actions,
            block_b=self._block_b)


# Pure-JAX reference matching the original PyTorch module semantics.
def _reference_forward(model, state_embed, action_indices):
    ae = jnp.take(model.embed_table, action_indices, axis=0)
    ae = ae.reshape(action_indices.shape[0], -1)
    x = jnp.concatenate([state_embed, ae], axis=1)
    h1 = jnp.maximum(x @ model.w1 + model.b1, 0.0)
    h2 = jnp.maximum(h1 @ model.w2 + model.b2, 0.0)
    return h2 @ model.w3 + model.b3


if __name__ == "__main__":
    key = jax.random.PRNGKey(0)
    k_model, k_state, k_act = jax.random.split(key, 3)

    state_embed_dim = 128
    action_embed_dim = 4
    num_actions = 6
    hidden_dim = 64

    # ---- small-shape f32 check (batch=2) ------------------------------------
    model = SharedEncoderRewardPredictorPallas(
        state_embed_dim=state_embed_dim,
        action_embed_dim=action_embed_dim,
        num_actions=num_actions,
        hidden_dim=hidden_dim,
        key=k_model,
        use_bf16=False,
    )

    batch = 2
    state_embed = jax.random.normal(k_state, (batch, state_embed_dim),
                                    dtype=jnp.float32)
    action_indices = jax.random.randint(k_act, (batch, 2), 0, num_actions,
                                        dtype=jnp.int32)

    reward = jax.block_until_ready(model(state_embed, action_indices))
    ref = jax.block_until_ready(
        _reference_forward(model, state_embed, action_indices))
    assert reward.shape == (batch, 1), reward.shape
    assert jnp.allclose(reward, ref, atol=1e-4, rtol=1e-4), (reward, ref)

    # ---- multi-tile f32 check (exercises partial last block + grid > 1) -----
    batch2 = 257
    se2 = jax.random.normal(k_state, (batch2, state_embed_dim),
                            dtype=jnp.float32)
    ai2 = jax.random.randint(k_act, (batch2, 2), 0, num_actions,
                             dtype=jnp.int32)
    r2 = jax.block_until_ready(model(se2, ai2))
    ref2 = jax.block_until_ready(_reference_forward(model, se2, ai2))
    assert r2.shape == (batch2, 1), r2.shape
    assert jnp.allclose(r2, ref2, atol=1e-4, rtol=1e-4)

    # ---- bf16 fast path (looser tolerance: bf16 storage, f32 accumulation) --
    model_bf16 = SharedEncoderRewardPredictorPallas(
        state_embed_dim=state_embed_dim,
        action_embed_dim=action_embed_dim,
        num_actions=num_actions,
        hidden_dim=hidden_dim,
        key=k_model,
        use_bf16=True,
    )
    r3 = jax.block_until_ready(model_bf16(se2, ai2))
    assert r3.shape == (batch2, 1), r3.shape
    assert bool(jnp.all(jnp.isfinite(r3)))
    assert jnp.allclose(r3, ref2, atol=1e-1, rtol=1e-1)

    print("KERNEL_OK")
</pallas_src>

<mosaic_0001>
module attributes {stable_mosaic.version = 11 : i64} {
  func.func @_reward_kernel(%arg0: i32, %arg1: memref<16x128xf32, #tpu.memory_space<vmem>>, %arg2: memref<16x2xi32, #tpu.memory_space<vmem>>, %arg3: memref<128x128xf32, #tpu.memory_space<vmem>>, %arg4: memref<40x128xf32, #tpu.memory_space<vmem>>, %arg5: memref<128x128xf32, #tpu.memory_space<vmem>>, %arg6: memref<1x128xf32, #tpu.memory_space<vmem>>, %arg7: memref<128x1xf32, #tpu.memory_space<vmem>>, %arg8: memref<1xf32, #tpu.memory_space<smem>>, %arg9: memref<16x1xf32, #tpu.memory_space<vmem>>) attributes {dimension_semantics = [#tpu.dimension_semantics<parallel>], iteration_bounds = array<i64: 1>, scalar_prefetch = 0 : i64, scratch_operands = 0 : i64, tpu.core_type = #tpu.core_type<tc>, window_params = [{transform_indices = @transform_0, window_bounds = array<i64: 16, 128>}, {transform_indices = @transform_1, window_bounds = array<i64: 16, 2>}, {pipeline_mode = #tpu.pipeline_mode<synchronous>, transform_indices = @transform_2, window_bounds = array<i64: 128, 128>}, {pipeline_mode = #tpu.pipeline_mode<synchronous>, transform_indices = @transform_3, window_bounds = array<i64: 40, 128>}, {pipeline_mode = #tpu.pipeline_mode<synchronous>, transform_indices = @transform_4, window_bounds = array<i64: 128, 128>}, {pipeline_mode = #tpu.pipeline_mode<synchronous>, transform_indices = @transform_5, window_bounds = array<i64: 1, 128>}, {pipeline_mode = #tpu.pipeline_mode<synchronous>, transform_indices = @transform_6, window_bounds = array<i64: 128, 1>}, {transform_indices = @transform_7, window_bounds = array<i64: 1>}, {transform_indices = @transform_8, window_bounds = array<i64: 16, 1>}]} {
    %c0 = arith.constant 0 : index
    %c0_0 = arith.constant 0 : index
    %0 = vector.load %arg2[%c0, %c0_0] : memref<16x2xi32, #tpu.memory_space<vmem>>, vector<16x1xi32>
    %c0_1 = arith.constant 0 : index
    %c1 = arith.constant 1 : index
    %1 = vector.load %arg2[%c0_1, %c1] : memref<16x2xi32, #tpu.memory_space<vmem>>, vector<16x1xi32>
    %c6_i32 = arith.constant 6 : i32
    %2 = vector.broadcast %c6_i32 : i32 to vector<16x1xi32>
    %3 = arith.muli %0, %2 : vector<16x1xi32>
    %4 = arith.addi %3, %1 : vector<16x1xi32>
    %5 = tpu.iota {dimensions = array<i32: 1>} : vector<16x40xi32>
    %6 = vector.broadcast %4 : vector<16x1xi32> to vector<16x40xi32>
    %7 = arith.cmpi eq, %5, %6 : vector<16x40xi32>
    %8 = arith.extui %7 : vector<16x40xi1> to vector<16x40xi32>
    %9 = arith.sitofp %8 : vector<16x40xi32> to vector<16x40xf32>
    %c0_2 = arith.constant 0 : index
    %c0_3 = arith.constant 0 : index
    %10 = vector.load %arg1[%c0_2, %c0_3] : memref<16x128xf32, #tpu.memory_space<vmem>>, vector<16x128xf32>
    %c0_4 = arith.constant 0 : index
    %c0_5 = arith.constant 0 : index
    %11 = vector.load %arg3[%c0_4, %c0_5] : memref<128x128xf32, #tpu.memory_space<vmem>>, vector<128x128xf32>
    %cst = arith.constant dense<0.000000e+00> : vector<16x128xf32>
    %12 = tpu.matmul %10, %11, %cst {dimension_numbers = #tpu.dot_dimension_numbers<[1], [0], [0], [1], [0, 0, 1, 1], [], []>} : vector<16x128xf32>, vector<128x128xf32>, vector<16x128xf32> -> vector<16x128xf32>
    %c0_6 = arith.constant 0 : index
    %c0_7 = arith.constant 0 : index
    %13 = vector.load %arg4[%c0_6, %c0_7] : memref<40x128xf32, #tpu.memory_space<vmem>>, vector<40x128xf32>
    %cst_8 = arith.constant dense<0.000000e+00> : vector<16x128xf32>
    %14 = tpu.matmul %9, %13, %cst_8 {dimension_numbers = #tpu.dot_dimension_numbers<[1], [0], [0], [1], [0, 0, 1, 1], [], []>} : vector<16x40xf32>, vector<40x128xf32>, vector<16x128xf32> -> vector<16x128xf32>
    %15 = arith.addf %12, %14 : vector<16x128xf32>
    %cst_9 = arith.constant 0.000000e+00 : f32
    %16 = vector.broadcast %cst_9 : f32 to vector<16x128xf32>
    %17 = arith.maximumf %15, %16 : vector<16x128xf32>
    %c0_10 = arith.constant 0 : index
    %c0_11 = arith.constant 0 : index
    %18 = vector.load %arg5[%c0_10, %c0_11] : memref<128x128xf32, #tpu.memory_space<vmem>>, vector<128x128xf32>
    %cst_12 = arith.constant dense<0.000000e+00> : vector<16x128xf32>
    %19 = tpu.matmul %17, %18, %cst_12 {dimension_numbers = #tpu.dot_dimension_numbers<[1], [0], [0], [1], [0, 0, 1, 1], [], []>} : vector<16x128xf32>, vector<128x128xf32>, vector<16x128xf32> -> vector<16x128xf32>
    %c0_13 = arith.constant 0 : index
    %c0_14 = arith.constant 0 : index
    %20 = vector.load %arg6[%c0_13, %c0_14] : memref<1x128xf32, #tpu.memory_space<vmem>>, vector<1x128xf32>
    %21 = vector.broadcast %20 : vector<1x128xf32> to vector<16x128xf32>
    %22 = arith.addf %19, %21 : vector<16x128xf32>
    %cst_15 = arith.constant 0.000000e+00 : f32
    %23 = vector.broadcast %cst_15 : f32 to vector<16x128xf32>
    %24 = arith.maximumf %22, %23 : vector<16x128xf32>
    %c0_16 = arith.constant 0 : index
    %c0_17 = arith.constant 0 : index
    %25 = vector.load %arg7[%c0_16, %c0_17] : memref<128x1xf32, #tpu.memory_space<vmem>>, vector<128x1xf32>
    %cst_18 = arith.constant dense<0.000000e+00> : vector<16x1xf32>
    %26 = tpu.matmul %24, %25, %cst_18 {dimension_numbers = #tpu.dot_dimension_numbers<[1], [0], [0], [1], [0, 0, 1, 1], [], []>} : vector<16x128xf32>, vector<128x1xf32>, vector<16x1xf32> -> vector<16x1xf32>
    %c0_19 = arith.constant 0 : index
    %27 = memref.load %arg8[%c0_19] : memref<1xf32, #tpu.memory_space<smem>>
    %28 = vector.broadcast %27 : f32 to vector<16x1xf32>
    %29 = arith.addf %26, %28 : vector<16x1xf32>
    %c0_20 = arith.constant 0 : index
    %c0_21 = arith.constant 0 : index
    %30 = vector.load %arg9[%c0_20, %c0_21] : memref<16x1xf32, #tpu.memory_space<vmem>>, vector<16x1xf32>
    tpu.vector_store %arg9[%c0_20, %c0_21], %29 {strides = array<i32>} : memref<16x1xf32, #tpu.memory_space<vmem>>, vector<16x1xf32>,
    return
  }
  func.func @transform_0(%arg0: i32) -> (i32, i32) {
    %c0_i32 = arith.constant 0 : i32
    %c0_i32_0 = arith.constant 0 : i32
    return %arg0, %c0_i32 : i32, i32
  }
  func.func @transform_1(%arg0: i32) -> (i32, i32) {
    %c0_i32 = arith.constant 0 : i32
    %c0_i32_0 = arith.constant 0 : i32
    return %arg0, %c0_i32 : i32, i32
  }
  func.func @transform_2(%arg0: i32) -> (i32, i32) {
    %c0_i32 = arith.constant 0 : i32
    %c0_i32_0 = arith.constant 0 : i32
    %c0_i32_1 = arith.constant 0 : i32
    return %c0_i32, %c0_i32_0 : i32, i32
  }
  func.func @transform_3(%arg0: i32) -> (i32, i32) {
    %c0_i32 = arith.constant 0 : i32
    %c0_i32_0 = arith.constant 0 : i32
    %c0_i32_1 = arith.constant 0 : i32
    return %c0_i32, %c0_i32_0 : i32, i32
  }
  func.func @transform_4(%arg0: i32) -> (i32, i32) {
    %c0_i32 = arith.constant 0 : i32
    %c0_i32_0 = arith.constant 0 : i32
    %c0_i32_1 = arith.constant 0 : i32
    return %c0_i32, %c0_i32_0 : i32, i32
  }
  func.func @transform_5(%arg0: i32) -> (i32, i32) {
    %c0_i32 = arith.constant 0 : i32
    %c0_i32_0 = arith.constant 0 : i32
    %c0_i32_1 = arith.constant 0 : i32
    return %c0_i32, %c0_i32_0 : i32, i32
  }
  func.func @transform_6(%arg0: i32) -> (i32, i32) {
    %c0_i32 = arith.constant 0 : i32
    %c0_i32_0 = arith.constant 0 : i32
    %c0_i32_1 = arith.constant 0 : i32
    return %c0_i32, %c0_i32_0 : i32, i32
  }
  func.func @transform_7(%arg0: i32) -> i32 {
    %c0_i32 = arith.constant 0 : i32
    %c0_i32_0 = arith.constant 0 : i32
    return %c0_i32 : i32
  }
  func.func @transform_8(%arg0: i32) -> (i32, i32) {
    %c0_i32 = arith.constant 0 : i32
    %c0_i32_0 = arith.constant 0 : i32
    return %arg0, %c0_i32 : i32, i32
  }
}

</mosaic_0001>

<llo_original>
// kernel: reward_forward_pallas.1
$region0: #{reward_forward_pallas.1}
  #allocation0 [shape = 'u32[]', space=smem, size = 0x4, offset = 0x4, fixed_abs, tag = 'smem constant byte address 0x4 - core index']
  #allocation1 [shape = 'u32[144,128]{1,0:T(1,128)}', space=vmem, size = 0x12000, scoped, tag = 'internal scratch']
  #allocation2 [shape = 'f32[1]{0:T(128)S(6)}', space=smem, size = 0x200, scoped, tag = 'scoped memory for reward_forward_pallas.1']
  %s0 = inlined_call_operand.vmem [shape: f32[2,128], index: 0, kind: input, shape index: {}]
  %s1 = inlined_call_operand.vmem [shape: s32[2,2], index: 1, kind: input, shape index: {}]
  %s2 = inlined_call_operand.vmem [shape: f32[128,128], index: 2, kind: input, shape index: {}]
  %s3 = inlined_call_operand.hbm [shape: f32[40,128], index: 3, kind: input, shape index: {}]
  %s4 = inlined_call_operand.hbm [shape: f32[128,128], index: 4, kind: input, shape index: {}]
  %s5 = inlined_call_operand.vmem [shape: f32[1,128], index: 5, kind: input, shape index: {}]
  %s6 = inlined_call_operand.vmem [shape: f32[128,1], index: 6, kind: input, shape index: {}]
  %s7 = inlined_call_operand.<no memory space> [shape: f32[1], index: 7, kind: input, shape index: {}]
  %s8 = inlined_call_operand.vmem [shape: f32[2,1], index: 8, kind: output, shape index: {}]
  %s9 = sld [smem:[#allocation0]]
  $region80: #{reward_forward_pallas.1} parent=0
    _
  %s11 = ssub.s32 1, %s9
  %s12 = scalar_select 0, %s11, %s9
  %13 = sst [smem:[#allocation2]] %s7
  $region1: #{reward_forward_pallas.1} parent=0
    #allocation3 [shape = 'u8[20480]{0}', space=vmem, size = 0x5000, scoped, tag = 'input window, operand 3, single buffered']
    #allocation4 [shape = 's32[1]{0}', space=sflag, size = 0x4, scoped, tag = 'scoped memory for reward_forward_pallas.1']
    #allocation5 [shape = 'u8[65536]{0}', space=vmem, size = 0x10000, scoped, tag = 'input window, operand 4, single buffered']
    #allocation6 [shape = 's32[1]{0}', space=sflag, size = 0x4, scoped, tag = 'scoped memory for reward_forward_pallas.1']
    #allocation7 [shape = 'u8[8192]{0}', space=vmem, size = 0x2000, scoped, tag = 'output window, operand 0, single buffered']
    %14 = vsyncpa [#allocation4], 0
    %15 = vsyncpa [#allocation6], 0
    // Predicated region
    $region2: #{reward_forward_pallas.1} parent=1 // pred_check
      _
    $region3: #{reward_forward_pallas.1} parent=1 // pred_check_branch
      %17 = sbr.rel (0) target = $region5
    $region4: #{reward_forward_pallas.1} parent=1 // pred_region
      _
    $region5: #{reward_forward_pallas.1} parent=1 // pred_fallthru
      _
    // Predicated region
    $region6: #{reward_forward_pallas.1} parent=1 // pred_check
      _
    $region7: #{reward_forward_pallas.1} parent=1 // pred_check_branch
      %19 = sbr.rel (0) target = $region9
    $region8: #{reward_forward_pallas.1} parent=1 // pred_region
      _
    $region9: #{reward_forward_pallas.1} parent=1 // pred_fallthru
      _
    // Predicated region
    $region10: #{reward_forward_pallas.1} parent=1 // pred_check
      _
    $region11: #{reward_forward_pallas.1} parent=1 // pred_check_branch
      %21 = sbr.rel (0) target = $region13
    $region12: #{reward_forward_pallas.1} parent=1 // pred_region
      _
    $region13: #{reward_forward_pallas.1} parent=1 // pred_fallthru
      _
    // Predicated region
    $region14: #{reward_forward_pallas.1} parent=1 // pred_check
      _
    $region15: #{reward_forward_pallas.1} parent=1 // pred_check_branch
      %23 = sbr.rel (0) target = $region17
    $region16: #{reward_forward_pallas.1} parent=1 // pred_region
      %s25 = ssub.s32 640, 640
      %26 = vsyncadd [#allocation4], %s25
      %s27 = sshll.u32 [#allocation3], 4
      %s28 = int_to_ptr.vmem [resolvable:$true] %s27
      %33 = dma.hbm_to_vmem [thread:$0]  %s3, 640, %s28, [#allocation4], 128, 128, 8
    $region17: #{reward_forward_pallas.1} parent=1 // pred_fallthru
      _
    // Predicated region
    $region18: #{reward_forward_pallas.1} parent=1 // pred_check
      _
    $region19: #{reward_forward_pallas.1} parent=1 // pred_check_branch
      %35 = sbr.rel (0) target = $region21
    $region20: #{reward_forward_pallas.1} parent=1 // pred_region
      %s37 = ssub.s32 2048, 2048
      %38 = vsyncadd [#allocation6], %s37
      %s39 = sshll.u32 [#allocation5], 4
      %s40 = int_to_ptr.vmem [resolvable:$true] %s39
      %45 = dma.hbm_to_vmem [thread:$0]  %s4, 2048, %s40, [#allocation6], 128, 128, 8
    $region21: #{reward_forward_pallas.1} parent=1 // pred_fallthru
      _
    // Predicated region
    $region22: #{reward_forward_pallas.1} parent=1 // pred_check
      _
    $region23: #{reward_forward_pallas.1} parent=1 // pred_check_branch
      %47 = sbr.rel (0) target = $region25
    $region24: #{reward_forward_pallas.1} parent=1 // pred_region
      _
    $region25: #{reward_forward_pallas.1} parent=1 // pred_fallthru
      _
    // Predicated region
    $region26: #{reward_forward_pallas.1} parent=1 // pred_check
      _
    $region27: #{reward_forward_pallas.1} parent=1 // pred_check_branch
      %49 = sbr.rel (0) target = $region29
    $region28: #{reward_forward_pallas.1} parent=1 // pred_region
      _
    $region29: #{reward_forward_pallas.1} parent=1 // pred_fallthru
      _
    // Predicated region
    $region30: #{reward_forward_pallas.1} parent=1 // pred_check
      _
    $region31: #{reward_forward_pallas.1} parent=1 // pred_check_branch
      %51 = sbr.rel (0) target = $region33
    $region32: #{reward_forward_pallas.1} parent=1 // pred_region
      _
    $region33: #{reward_forward_pallas.1} parent=1 // pred_fallthru
      _
    // Predicated region
    $region34: #{reward_forward_pallas.1} parent=1 // pred_check
      _
    $region35: #{reward_forward_pallas.1} parent=1 // pred_check_branch
      %53 = sbr.rel (0) target = $region37
    $region36: #{reward_forward_pallas.1} parent=1 // pred_region
      %54 = dma.done [#allocation4], 640
    $region37: #{reward_forward_pallas.1} parent=1 // pred_fallthru
      _
    // Predicated region
    $region38: #{reward_forward_pallas.1} parent=1 // pred_check
      _
    $region39: #{reward_forward_pallas.1} parent=1 // pred_check_branch
      %56 = sbr.rel (0) target = $region41
    $region40: #{reward_forward_pallas.1} parent=1 // pred_region
      %57 = dma.done [#allocation6], 2048
    $region41: #{reward_forward_pallas.1} parent=1 // pred_fallthru
      _
    %v58 = vld [vmem:[%s1] sm:$0xff]
    %v59 = vld [vmem:[%s1 + $0x8] sm:$0xff]
    %v60 = vmul.u32 %v58, 6
    %v61 = vmul.u32 %v59, 6
    %62 = vrot.lane.b32.xlu0 %v58, 127
    %v63 = vpop.permute.xlu0 %62
    %64 = vrot.lane.b32.xlu0 %v59, 127
    %v65 = vpop.permute.xlu0 %64
    %v66 = vadd.s32 %v60, %v63
    %v67 = vadd.s32 %v61, %v65
    %v68 = vlaneseq
    %v69 = vand.u32 %v68, 127
    %70 = vset.pattern.permute.xlu0 0
    %71 = vperm.xlu0 %70, %v66
    %v72 = vpop.permute.xlu0 %71
    %73 = vset.pattern.permute.xlu0 0
    %74 = vperm.xlu0 %73, %v67
    %v75 = vpop.permute.xlu0 %74
    %vm76 = vcmp.eq.s32.totalorder %v69, %v72
    %vm77 = vcmp.eq.s32.totalorder %v69, %v75
    %v78 = vsel %vm76, 1, 0
    %v79 = vsel %vm77, 1, 0
    %v80 = vcvt.s32.f32 %v78
    %v81 = vcvt.s32.f32 %v79
    %v82 = vld [vmem:[%s0] sm:$0xff]
    %v83 = vld [vmem:[%s0 + $0x8] sm:$0xff]
    %v84 = vld [vmem:[%s2] sm:$0xff]
    %v85 = vld [vmem:[%s2 + $0x8] sm:$0xff]
    %v86 = vld [vmem:[%s2 + $0x10] sm:$0xff]
    %v87 = vld [vmem:[%s2 + $0x18] sm:$0xff]
    %v88 = vld [vmem:[%s2 + $0x20] sm:$0xff]
    %v89 = vld [vmem:[%s2 + $0x28] sm:$0xff]
    %v90 = vld [vmem:[%s2 + $0x30] sm:$0xff]
    %v91 = vld [vmem:[%s2 + $0x38] sm:$0xff]
    %v92 = vld [vmem:[%s2 + $0x40] sm:$0xff]
    %v93 = vld [vmem:[%s2 + $0x48] sm:$0xff]
    %v94 = vld [vmem:[%s2 + $0x50] sm:$0xff]
    %v95 = vld [vmem:[%s2 + $0x58] sm:$0xff]
    %v96 = vld [vmem:[%s2 + $0x60] sm:$0xff]
    %v97 = vld [vmem:[%s2 + $0x68] sm:$0xff]
    %v98 = vld [vmem:[%s2 + $0x70] sm:$0xff]
    %v99 = vld [vmem:[%s2 + $0x78] sm:$0xff]
    %v100 = vld [vmem:[#allocation3] sm:$0xff]
    %v101 = vld [vmem:[#allocation3 + $0x8] sm:$0xff]
    %v102 = vld [vmem:[#allocation3 + $0x10] sm:$0xff]
    %v103 = vld [vmem:[#allocation3 + $0x18] sm:$0xff]
    %v104 = vld [vmem:[#allocation3 + $0x20] sm:$0xff]
    %vm105 = vcmask 326656
    %v107 = vsel %vm105, %v80, 0
    %v110 = vsel %vm105, %v81, 0
    %112 = vmatprep.subr.mxu0 0.0
    %113 = vmatpush1.msra.mxu0 0.0
    %114 = vmatprep.subr.mxu0 0.0
    %115 = vmatpush1.msra.mxu0 0.0
    %116 = vmatprep.subr.mxu0 0.0
    %117 = vmatpush1.msra.mxu0 0.0
    %118 = vmatprep.subr.mxu0 0.0
    %119 = vmatpush1.msra.mxu0 0.0
    %120 = vmatprep.subr.mxu0 0.0
    %121 = vmatpush1.msra.mxu0 0.0
    %122 = vmatprep.subr.mxu0 0.0
    %123 = vmatpush1.msra.mxu0 0.0
    %124 = vmatprep.subr.mxu0 0.0
    %125 = vmatpush1.msra.mxu0 0.0
    %126 = vmatprep.subr.mxu0 0.0
    %127 = vmatpush1.msra.mxu0 0.0
    %128 = vmatprep.subr.mxu0 0.0
    %129 = vmatpush1.msra.mxu0 0.0
    %130 = vmatprep.subr.mxu0 0.0
    %131 = vmatpush1.msra.mxu0 0.0
    %132 = vmatprep.subr.mxu0 0.0
    %133 = vmatpush1.msra.mxu0 0.0
    %134 = vmatprep.subr.mxu0 0.0
    %135 = vmatpush1.msra.mxu0 %v104
    %136 = vmatprep.subr.mxu0 0.0
    %137 = vmatpush1.msra.mxu0 %v103
    %138 = vmatprep.subr.mxu0 0.0
    %139 = vmatpush1.msra.mxu0 %v102
    %140 = vmatprep.subr.mxu0 0.0
    %141 = vmatpush1.msra.mxu0 %v101
    %142 = vmatprep.subr.mxu0 0.0
    %143 = vmatpush1.msra.mxu0 %v100
    %144 = vmatprep.subr.mxu0 0.0
    %145 = vmatpush2.msra.mxu0 0.0
    %146 = vmatprep.subr.mxu0 0.0
    %147 = vmatpush2.msra.mxu0 0.0
    %148 = vmatprep.subr.mxu0 0.0
    %149 = vmatpush2.msra.mxu0 0.0
    %150 = vmatprep.subr.mxu0 0.0
    %151 = vmatpush2.msra.mxu0 0.0
    %152 = vmatprep.subr.mxu0 0.0
    %153 = vmatpush2.msra.mxu0 0.0
    %154 = vmatprep.subr.mxu0 0.0
    %155 = vmatpush2.msra.mxu0 0.0
    %156 = vmatprep.subr.mxu0 0.0
    %157 = vmatpush2.msra.mxu0 0.0
    %158 = vmatprep.subr.mxu0 0.0
    %159 = vmatpush2.msra.mxu0 0.0
    %160 = vmatprep.subr.mxu0 0.0
    %161 = vmatpush2.msra.mxu0 0.0
    %162 = vmatprep.subr.mxu0 0.0
    %163 = vmatpush2.msra.mxu0 0.0
    %164 = vmatprep.subr.mxu0 0.0
    %165 = vmatpush2.msra.mxu0 0.0
    %166 = vmatprep.subr.mxu0 0.0
    %167 = vmatpush2.msra.mxu0 0.0
    %168 = vmatprep.subr.mxu0 0.0
    %169 = vmatpush2.msra.mxu0 0.0
    %170 = vmatprep.subr.mxu0 0.0
    %171 = vmatpush2.msra.mxu0 0.0
    %172 = vmatprep.subr.mxu0 0.0
    %173 = vmatpush2.msra.mxu0 0.0
    %174 = vmatprep.subr.mxu0 0.0
    %175 = vmatpush2.msra.mxu0 0.0
    %176 = vmatprep.mubr.f32.mxu0 0.0
    %177 = vmatmul.mubr.f32.gmra.mxu0 %v107
    %v178 = vpop.f32.mrf.mxu0
    %v179 = vadd.f32 0.0, %v178
    %v180 = vpop.f32.mrf.mxu0
    %181 = vmatprep.mubr.f32.mxu0 0.0
    %182 = vmatmul.mubr.f32.gmra.mxu0 %v110
    %v183 = vpop.f32.mrf.mxu0
    %v184 = vadd.f32 0.0, %v183
    %v185 = vpop.f32.mrf.mxu0
    %186 = vdwg.mxu0
    %187 = vmatprep.subr.mxu0 0.0
    %188 = vmatpush1.msra.mxu0 %v99
    %189 = vmatprep.subr.mxu0 0.0
    %190 = vmatpush1.msra.mxu0 %v98
    %191 = vmatprep.subr.mxu0 0.0
    %192 = vmatpush1.msra.mxu0 %v97
    %193 = vmatprep.subr.mxu0 0.0
    %194 = vmatpush1.msra.mxu0 %v96
    %195 = vmatprep.subr.mxu0 0.0
    %196 = vmatpush1.msra.mxu0 %v95
    %197 = vmatprep.subr.mxu0 0.0
    %198 = vmatpush1.msra.mxu0 %v94
    %199 = vmatprep.subr.mxu0 0.0
    %200 = vmatpush1.msra.mxu0 %v93
    %201 = vmatprep.subr.mxu0 0.0
    %202 = vmatpush1.msra.mxu0 %v92
    %203 = vmatprep.subr.mxu0 0.0
    %204 = vmatpush1.msra.mxu0 %v91
    %205 = vmatprep.subr.mxu0 0.0
    %206 = vmatpush1.msra.mxu0 %v90
    %207 = vmatprep.subr.mxu0 0.0
    %208 = vmatpush1.msra.mxu0 %v89
    %209 = vmatprep.subr.mxu0 0.0
    %210 = vmatpush1.msra.mxu0 %v88
    %211 = vmatprep.subr.mxu0 0.0
    %212 = vmatpush1.msra.mxu0 %v87
    %213 = vmatprep.subr.mxu0 0.0
    %214 = vmatpush1.msra.mxu0 %v86
    %215 = vmatprep.subr.mxu0 0.0
    %216 = vmatpush1.msra.mxu0 %v85
    %217 = vmatprep.subr.mxu0 0.0
    %218 = vmatpush1.msra.mxu0 %v84
    %219 = vmatprep.subr.mxu0 0.0
    %220 = vmatpush2.msra.mxu0 0.0
    %221 = vmatprep.subr.mxu0 0.0
    %222 = vmatpush2.msra.mxu0 0.0
    %223 = vmatprep.subr.mxu0 0.0
    %224 = vmatpush2.msra.mxu0 0.0
    %225 = vmatprep.subr.mxu0 0.0
    %226 = vmatpush2.msra.mxu0 0.0
    %227 = vmatprep.subr.mxu0 0.0
    %228 = vmatpush2.msra.mxu0 0.0
    %229 = vmatprep.subr.mxu0 0.0
    %230 = vmatpush2.msra.mxu0 0.0
    %231 = vmatprep.subr.mxu0 0.0
    %232 = vmatpush2.msra.mxu0 0.0
    %233 = vmatprep.subr.mxu0 0.0
    %234 = vmatpush2.msra.mxu0 0.0
    %235 = vmatprep.subr.mxu0 0.0
    %236 = vmatpush2.msra.mxu0 0.0
    %237 = vmatprep.subr.mxu0 0.0
    %238 = vmatpush2.msra.mxu0 0.0
    %239 = vmatprep.subr.mxu0 0.0
    %240 = vmatpush2.msra.mxu0 0.0
    %241 = vmatprep.subr.mxu0 0.0
    %242 = vmatpush2.msra.mxu0 0.0
    %243 = vmatprep.subr.mxu0 0.0
    %244 = vmatpush2.msra.mxu0 0.0
    %245 = vmatprep.subr.mxu0 0.0
    %246 = vmatpush2.msra.mxu0 0.0
    %247 = vmatprep.subr.mxu0 0.0
    %248 = vmatpush2.msra.mxu0 0.0
    %249 = vmatprep.subr.mxu0 0.0
    %250 = vmatpush2.msra.mxu0 0.0
    %251 = vmatprep.mubr.f32.mxu0 0.0
    %252 = vmatmul.mubr.f32.gmra.mxu0 %v82
    %v253 = vpop.f32.mrf.mxu0
    %v254 = vadd.f32 %v179, %v253
    %v255 = vpop.f32.mrf.mxu0
    %256 = vmatprep.mubr.f32.mxu0 0.0
    %257 = vmatmul.mubr.f32.gmra.mxu0 %v83
    %v258 = vpop.f32.mrf.mxu0
    %v259 = vadd.f32 %v184, %v258
    %v260 = vpop.f32.mrf.mxu0
    %261 = vdwg.mxu0
    %v262 = vmax.f32 %v254, 0.0
    %v263 = vmax.f32 %v259, 0.0
    %v264 = vld [vmem:[#allocation5] sm:$0xff]
    %v265 = vld [vmem:[#allocation5 + $0x8] sm:$0xff]
    %v266 = vld [vmem:[#allocation5 + $0x10] sm:$0xff]
    %v267 = vld [vmem:[#allocation5 + $0x18] sm:$0xff]
    %v268 = vld [vmem:[#allocation5 + $0x20] sm:$0xff]
    %v269 = vld [vmem:[#allocation5 + $0x28] sm:$0xff]
    %v270 = vld [vmem:[#allocation5 + $0x30] sm:$0xff]
    %v271 = vld [vmem:[#allocation5 + $0x38] sm:$0xff]
    %v272 = vld [vmem:[#allocation5 + $0x40] sm:$0xff]
    %v273 = vld [vmem:[#allocation5 + $0x48] sm:$0xff]
    %v274 = vld [vmem:[#allocation5 + $0x50] sm:$0xff]
    %v275 = vld [vmem:[#allocation5 + $0x58] sm:$0xff]
    %v276 = vld [vmem:[#allocation5 + $0x60] sm:$0xff]
    %v277 = vld [vmem:[#allocation5 + $0x68] sm:$0xff]
    %v278 = vld [vmem:[#allocation5 + $0x70] sm:$0xff]
    %v279 = vld [vmem:[#allocation5 + $0x78] sm:$0xff]
    %v280 = vld [vmem:[%s5] sm:$0x1]
    %v282 = vlaneseq
    %v283 = vshrl.u32 %v282, 7
    %v284 = vsub.s32 0, %v283
    %v285 = vrot.slane %v280, %v284
    %287 = vmatprep.subr.mxu0 0.0
    %288 = vmatpush1.msra.mxu0 %v279
    %289 = vmatprep.subr.mxu0 0.0
    %290 = vmatpush1.msra.mxu0 %v278
    %291 = vmatprep.subr.mxu0 0.0
    %292 = vmatpush1.msra.mxu0 %v277
    %293 = vmatprep.subr.mxu0 0.0
    %294 = vmatpush1.msra.mxu0 %v276
    %295 = vmatprep.subr.mxu0 0.0
    %296 = vmatpush1.msra.mxu0 %v275
    %297 = vmatprep.subr.mxu0 0.0
    %298 = vmatpush1.msra.mxu0 %v274
    %299 = vmatprep.subr.mxu0 0.0
    %300 = vmatpush1.msra.mxu0 %v273
    %301 = vmatprep.subr.mxu0 0.0
    %302 = vmatpush1.msra.mxu0 %v272
    %303 = vmatprep.subr.mxu0 0.0
    %304 = vmatpush1.msra.mxu0 %v271
    %305 = vmatprep.subr.mxu0 0.0
    %306 = vmatpush1.msra.mxu0 %v270
    %307 = vmatprep.subr.mxu0 0.0
    %308 = vmatpush1.msra.mxu0 %v269
    %309 = vmatprep.subr.mxu0 0.0
    %310 = vmatpush1.msra.mxu0 %v268
    %311 = vmatprep.subr.mxu0 0.0
    %312 = vmatpush1.msra.mxu0 %v267
    %313 = vmatprep.subr.mxu0 0.0
    %314 = vmatpush1.msra.mxu0 %v266
    %315 = vmatprep.subr.mxu0 0.0
    %316 = vmatpush1.msra.mxu0 %v265
    %317 = vmatprep.subr.mxu0 0.0
    %318 = vmatpush1.msra.mxu0 %v264
    %319 = vmatprep.subr.mxu0 0.0
    %320 = vmatpush2.msra.mxu0 0.0
    %321 = vmatprep.subr.mxu0 0.0
    %322 = vmatpush2.msra.mxu0 0.0
    %323 = vmatprep.subr.mxu0 0.0
    %324 = vmatpush2.msra.mxu0 0.0
    %325 = vmatprep.subr.mxu0 0.0
    %326 = vmatpush2.msra.mxu0 0.0
    %327 = vmatprep.subr.mxu0 0.0
    %328 = vmatpush2.msra.mxu0 0.0
    %329 = vmatprep.subr.mxu0 0.0
    %330 = vmatpush2.msra.mxu0 0.0
    %331 = vmatprep.subr.mxu0 0.0
    %332 = vmatpush2.msra.mxu0 0.0
    %333 = vmatprep.subr.mxu0 0.0
    %334 = vmatpush2.msra.mxu0 0.0
    %335 = vmatprep.subr.mxu0 0.0
    %336 = vmatpush2.msra.mxu0 0.0
    %337 = vmatprep.subr.mxu0 0.0
    %338 = vmatpush2.msra.mxu0 0.0
    %339 = vmatprep.subr.mxu0 0.0
    %340 = vmatpush2.msra.mxu0 0.0
    %341 = vmatprep.subr.mxu0 0.0
    %342 = vmatpush2.msra.mxu0 0.0
    %343 = vmatprep.subr.mxu0 0.0
    %344 = vmatpush2.msra.mxu0 0.0
    %345 = vmatprep.subr.mxu0 0.0
    %346 = vmatpush2.msra.mxu0 0.0
    %347 = vmatprep.subr.mxu0 0.0
    %348 = vmatpush2.msra.mxu0 0.0
    %349 = vmatprep.subr.mxu0 0.0
    %350 = vmatpush2.msra.mxu0 0.0
    %351 = vmatprep.mubr.f32.mxu0 0.0
    %352 = vmatmul.mubr.f32.gmra.mxu0 %v262
    %v353 = vpop.f32.mrf.mxu0
    %v354 = vadd.f32 %v285, %v353
    %v355 = vpop.f32.mrf.mxu0
    %356 = vmatprep.mubr.f32.mxu0 0.0
    %357 = vmatmul.mubr.f32.gmra.mxu0 %v263
    %v358 = vpop.f32.mrf.mxu0
    %v359 = vadd.f32 %v285, %v358
    %v360 = vpop.f32.mrf.mxu0
    %361 = vdwg.mxu0
    %v362 = vmax.f32 %v354, 0.0
    %v363 = vmax.f32 %v359, 0.0
    %v364 = vld [vmem:[%s6] sm:$0xff]
    %v365 = vld [vmem:[%s6 + $0x8] sm:$0xff]
    %v366 = vld [vmem:[%s6 + $0x10] sm:$0xff]
    %v367 = vld [vmem:[%s6 + $0x18] sm:$0xff]
    %v368 = vld [vmem:[%s6 + $0x20] sm:$0xff]
    %v369 = vld [vmem:[%s6 + $0x28] sm:$0xff]
    %v370 = vld [vmem:[%s6 + $0x30] sm:$0xff]
    %v371 = vld [vmem:[%s6 + $0x38] sm:$0xff]
    %v372 = vld [vmem:[%s6 + $0x40] sm:$0xff]
    %v373 = vld [vmem:[%s6 + $0x48] sm:$0xff]
    %v374 = vld [vmem:[%s6 + $0x50] sm:$0xff]
    %v375 = vld [vmem:[%s6 + $0x58] sm:$0xff]
    %v376 = vld [vmem:[%s6 + $0x60] sm:$0xff]
    %v377 = vld [vmem:[%s6 + $0x68] sm:$0xff]
    %v378 = vld [vmem:[%s6 + $0x70] sm:$0xff]
    %v379 = vld [vmem:[%s6 + $0x78] sm:$0xff]
    %s380 = sld [smem:[#allocation2]]
    %v381 = vstv %s380
    %382 = vmatprep.subr.mxu0 0.0
    %383 = vmatpush1.msra.mxu0 %v379
    %384 = vmatprep.subr.mxu0 0.0
    %385 = vmatpush1.msra.mxu0 %v378
    %386 = vmatprep.subr.mxu0 0.0
    %387 = vmatpush1.msra.mxu0 %v377
    %388 = vmatprep.subr.mxu0 0.0
    %389 = vmatpush1.msra.mxu0 %v376
    %390 = vmatprep.subr.mxu0 0.0
    %391 = vmatpush1.msra.mxu0 %v375
    %392 = vmatprep.subr.mxu0 0.0
    %393 = vmatpush1.msra.mxu0 %v374
    %394 = vmatprep.subr.mxu0 0.0
    %395 = vmatpush1.msra.mxu0 %v373
    %396 = vmatprep.subr.mxu0 0.0
    %397 = vmatpush1.msra.mxu0 %v372
    %398 = vmatprep.subr.mxu0 0.0
    %399 = vmatpush1.msra.mxu0 %v371
    %400 = vmatprep.subr.mxu0 0.0
    %401 = vmatpush1.msra.mxu0 %v370
    %402 = vmatprep.subr.mxu0 0.0
    %403 = vmatpush1.msra.mxu0 %v369
    %404 = vmatprep.subr.mxu0 0.0
    %405 = vmatpush1.msra.mxu0 %v368
    %406 = vmatprep.subr.mxu0 0.0
    %407 = vmatpush1.msra.mxu0 %v367
    %408 = vmatprep.subr.mxu0 0.0
    %409 = vmatpush1.msra.mxu0 %v366
    %410 = vmatprep.subr.mxu0 0.0
    %411 = vmatpush1.msra.mxu0 %v365
    %412 = vmatprep.subr.mxu0 0.0
    %413 = vmatpush1.msra.mxu0 %v364
    %414 = vmatprep.subr.mxu0 0.0
    %415 = vmatpush2.msra.mxu0 0.0
    %416 = vmatprep.subr.mxu0 0.0
    %417 = vmatpush2.msra.mxu0 0.0
    %418 = vmatprep.subr.mxu0 0.0
    %419 = vmatpush2.msra.mxu0 0.0
    %420 = vmatprep.subr.mxu0 0.0
    %421 = vmatpush2.msra.mxu0 0.0
    %422 = vmatprep.subr.mxu0 0.0
    %423 = vmatpush2.msra.mxu0 0.0
    %424 = vmatprep.subr.mxu0 0.0
    %425 = vmatpush2.msra.mxu0 0.0
    %426 = vmatprep.subr.mxu0 0.0
    %427 = vmatpush2.msra.mxu0 0.0
    %428 = vmatprep.subr.mxu0 0.0
    %429 = vmatpush2.msra.mxu0 0.0
    %430 = vmatprep.subr.mxu0 0.0
    %431 = vmatpush2.msra.mxu0 0.0
    %432 = vmatprep.subr.mxu0 0.0
    %433 = vmatpush2.msra.mxu0 0.0
    %434 = vmatprep.subr.mxu0 0.0
    %435 = vmatpush2.msra.mxu0 0.0
    %436 = vmatprep.subr.mxu0 0.0
    %437 = vmatpush2.msra.mxu0 0.0
    %438 = vmatprep.subr.mxu0 0.0
    %439 = vmatpush2.msra.mxu0 0.0
    %440 = vmatprep.subr.mxu0 0.0
    %441 = vmatpush2.msra.mxu0 0.0
    %442 = vmatprep.subr.mxu0 0.0
    %443 = vmatpush2.msra.mxu0 0.0
    %444 = vmatprep.subr.mxu0 0.0
    %445 = vmatpush2.msra.mxu0 0.0
    %446 = vmatprep.mubr.f32.mxu0 0.0
    %447 = vmatmul.mubr.f32.gmra.mxu0 %v362
    %v448 = vpop.f32.mrf.mxu0
    %v449 = vadd.f32 %v381, %v448
    %v450 = vpop.f32.mrf.mxu0
    %451 = vmatprep.mubr.f32.mxu0 0.0
    %452 = vmatmul.mubr.f32.gmra.mxu0 %v363
    %v453 = vpop.f32.mrf.mxu0
    %v454 = vadd.f32 %v381, %v453
    %v455 = vpop.f32.mrf.mxu0
    %456 = vdwg.mxu0
    %vm457 = vcmask 7168
    %458 = vst.msk [vmem:[#allocation7] sm:$0xff] %vm457, %v449
    %459 = vst.msk [vmem:[#allocation7 + $0x8] sm:$0xff] %vm457, %v454
    // Predicated region
    $region42: #{reward_forward_pallas.1} parent=1 // pred_check
      _
    $region43: #{reward_forward_pallas.1} parent=1 // pred_check_branch
      %461 = sbr.rel (0) target = $region45
    $region44: #{reward_forward_pallas.1} parent=1 // pred_region
      // Predicated region
      $region46: #{reward_forward_pallas.1} parent=44 // pred_check
        _
      $region47: #{reward_forward_pallas.1} parent=44 // pred_check_branch
        %463 = sbr.rel (0) target = $region49
      $region48: #{reward_forward_pallas.1} parent=44 // pred_region
        // Predicated region
        $region50: #{reward_forward_pallas.1} parent=48 // pred_check
          _
        $region51: #{reward_forward_pallas.1} parent=48 // pred_check_branch
          %465 = sbr.rel target = $region53
        $region52: #{reward_forward_pallas.1} parent=48 // pred_region
          // Predicated region
          $region65: #{reward_forward_pallas.1} parent=52 // pred_check
            _
          $region66: #{reward_forward_pallas.1} parent=52 // pred_check_branch
            %481 = sbr.rel (0) target = $region68
          $region67: #{reward_forward_pallas.1} parent=52 // pred_region
            %s483 = ssub.s32 4, 1
            loop: start=0, step=1, limit=1
            $region69: #{reward_forward_pallas.1} parent=67 // loop_pre_header
              _
            $region70: #{reward_forward_pallas.1} parent=67 // loop_header
              %s485 = sphi 0, %s489
              %p486 = scmp.ge.s32.totalorder %s485, 1
              %s490 = sphi [#allocation7], [#allocation7]
              %s491 = sphi %s8, %s8
            $region71: #{reward_forward_pallas.1} parent=67 // loop_header_branch
              %488 = sbr.rel (%p486) target = $region75
            $region72: #{reward_forward_pallas.1} parent=67 // loop_body
              %v492 = vld [vmem:[%s490] sm:%s483]
              %493 = vst [vmem:[%s491] sm:%s483] %v492
            $region73: #{reward_forward_pallas.1} parent=67 // loop_footer
              %s489 = sadd.s32 1, %s485
            $region74: #{reward_forward_pallas.1} parent=67 // loop_footer_branch
              %484 = sbr.rel target = $region70
            $region75: #{reward_forward_pallas.1} parent=67 // loop_exit
              _
          $region68: #{reward_forward_pallas.1} parent=52 // pred_fallthru
            _
        $region53: #{reward_forward_pallas.1} parent=48 // pred_fallthru
          _
        // Predicated region
        $region54: #{reward_forward_pallas.1} parent=48 // pred_check
          _
        $region55: #{reward_forward_pallas.1} parent=48 // pred_check_branch
          %467 = sbr.rel (0) target = $region57
        $region56: #{reward_forward_pallas.1} parent=48 // pred_region
          %s469 = ssub.s32 4, 1
          loop: start=0, step=1, limit=1
          $region58: #{reward_forward_pallas.1} parent=56 // loop_pre_header
            _
          $region59: #{reward_forward_pallas.1} parent=56 // loop_header
            %s471 = sphi 0, %s475
            %p472 = scmp.ge.s32.totalorder %s471, 1
            %s476 = sphi [#allocation7], [#allocation7]
            %s477 = sphi %s8, %s8
          $region60: #{reward_forward_pallas.1} parent=56 // loop_header_branch
            %474 = sbr.rel (%p472) target = $region64
          $region61: #{reward_forward_pallas.1} parent=56 // loop_body
            %v478 = vld [vmem:[%s476] sm:%s469]
            %479 = vst [vmem:[%s477] sm:%s469] %v478
          $region62: #{reward_forward_pallas.1} parent=56 // loop_footer
            %s475 = sadd.s32 1, %s471
          $region63: #{reward_forward_pallas.1} parent=56 // loop_footer_branch
            %470 = sbr.rel target = $region59
          $region64: #{reward_forward_pallas.1} parent=56 // loop_exit
            _
        $region57: #{reward_forward_pallas.1} parent=48 // pred_fallthru
          _
      $region49: #{reward_forward_pallas.1} parent=44 // pred_fallthru
        _
      %494 = vnop
    $region45: #{reward_forward_pallas.1} parent=1 // pred_fallthru
      _
    // Predicated region
    $region76: #{reward_forward_pallas.1} parent=1 // pred_check
      _
    $region77: #{reward_forward_pallas.1} parent=1 // pred_check_branch
      %496 = sbr.rel (0) target = $region79
    $region78: #{reward_forward_pallas.1} parent=1 // pred_region
      _
    $region79: #{reward_forward_pallas.1} parent=1 // pred_fallthru
      _
    %497 = vsyncpa [#allocation4], 1
    %498 = vsyncpa [#allocation6], 1

</llo_original>
